<compile_context>
chip_gen: v7x
topology: tpu7x:2x2x1
jax: 0.10.0
libtpu: 0.0.40
codegen_flags: <defaults>
</compile_context>

<pallas_src>
import jax
import jax.numpy as jnp
from jax.experimental import pallas as pl
from jax.experimental.pallas import tpu as pltpu

N_INPUT = 7
N_OUTPUT = 6
N_H = 2            # module's n_h (>=1); n_h - 1 hidden->hidden Linear layers
SIZE_H = 128

TILE_B_MAX = 2048  # big tiles amortize per-grid-step overhead; VMEM footprint stays tiny
N_OUT_PAD = 8      # output slab width (== out_shape last dim, so any width is legal)


def _cdiv(a, b):
    return (a + b - 1) // b


def _round_up(x, m):
    return ((x + m - 1) // m) * m


def _activation_dtype():
    """bf16 bias-add/tanh on chips with a bf16 VPU/EUP path (v6e and newer); f32 otherwise."""
    try:
        kind = jax.devices()[0].device_kind.lower()
    except Exception:
        return jnp.float32
    for old in ("v2", "v3", "v4", "v5"):
        if old in kind:
            return jnp.float32
    return jnp.bfloat16


def _make_mlp_kernel(n_hidden, act_dtype):
    """n_hidden = number of hidden->hidden Linear layers (n_h - 1)."""

    def kernel(*refs):
        x_ref, w_in_ref, b_in_ref = refs[0], refs[1], refs[2]
        w_out_ref, b_out_ref = refs[3 + 2 * n_hidden], refs[4 + 2 * n_hidden]
        o_ref = refs[5 + 2 * n_hidden]

        # fc_in + tanh : bf16 MXU operands, f32 accumulation, activation in act_dtype.
        x = x_ref[...].astype(jnp.bfloat16)
        h = jnp.dot(x, w_in_ref[...], preferred_element_type=jnp.float32) + b_in_ref[...]
        h = jnp.tanh(h.astype(act_dtype))

        # hidden Linear(s) + tanh (statically unrolled over n_hidden layers).
        for l in range(n_hidden):
            w_ref = refs[3 + 2 * l]
            b_ref = refs[4 + 2 * l]
            h = (jnp.dot(h.astype(jnp.bfloat16), w_ref[...],
                         preferred_element_type=jnp.float32)
                 + b_ref[...])
            h = jnp.tanh(h.astype(act_dtype))

        # fc_out (no activation); narrow 8-lane slab keeps HBM writeback small.
        o_ref[...] = (
            jnp.dot(h.astype(jnp.bfloat16), w_out_ref[...],
                    preferred_element_type=jnp.float32)
            + b_out_ref[...]
        ).astype(o_ref.dtype)

    return kernel


def mlp_forward(x, params):
    """x: (..., N_INPUT) float32 -> (batch, N_OUTPUT) float32."""
    w_in, b_in, hidden, w_out, b_out = params
    n_hidden = len(hidden)

    x = x.reshape(-1, N_INPUT)           # mirrors x.view(-1, n_input)
    batch = x.shape[0]

    # Balanced batch tiling: tiles of (near-)equal size, multiple of 8 sublanes.
    n_tiles = _cdiv(batch, TILE_B_MAX)
    tile_b = _round_up(_cdiv(batch, n_tiles), 8)
    if batch > 8:
        # Guarantee >= 2 grid steps so v7x megacore can shard the "parallel" axis.
        tile_b = min(tile_b, _round_up(_cdiv(batch, 2), 8))
    padded_batch = _round_up(batch, tile_b)
    if padded_batch != batch:
        x = jnp.pad(x, ((0, padded_batch - batch), (0, 0)))   # single wrapper pass over x

    # bf16 MXU weight operands; biases stay f32 (added to the f32 accumulator).
    w_in_bf = w_in.astype(jnp.bfloat16)
    hidden_flat = []
    for w_h, b_h in hidden:
        hidden_flat += [w_h.astype(jnp.bfloat16), b_h]

    # Pad fc_out from 6 -> 8 output lanes (block last dim == full array dim -> legal spec).
    w_out_p = jnp.zeros((SIZE_H, N_OUT_PAD), jnp.float32).at[:, :N_OUTPUT].set(w_out)
    b_out_p = jnp.zeros((1, N_OUT_PAD), jnp.float32).at[:, :N_OUTPUT].set(b_out)
    w_out_bf = w_out_p.astype(jnp.bfloat16)

    grid = (padded_batch // tile_b,)

    def resident(shape):
        # Same block every grid step -> stays in VMEM across iterations.
        return pl.BlockSpec(shape, lambda i: (0, 0))

    in_specs = [pl.BlockSpec((tile_b, N_INPUT), lambda i: (i, 0)),
                resident((N_INPUT, SIZE_H)),
                resident((1, SIZE_H))]
    for _ in range(n_hidden):
        in_specs += [resident((SIZE_H, SIZE_H)), resident((1, SIZE_H))]
    in_specs += [resident((SIZE_H, N_OUT_PAD)), resident((1, N_OUT_PAD))]

    flops = 2 * padded_batch * (
        N_INPUT * SIZE_H + n_hidden * SIZE_H * SIZE_H + SIZE_H * N_OUT_PAD)
    transcendentals = padded_batch * (1 + n_hidden) * SIZE_H
    weight_bytes = (N_INPUT * SIZE_H * 2 + SIZE_H * 4
                    + n_hidden * (SIZE_H * SIZE_H * 2 + SIZE_H * 4)
                    + SIZE_H * N_OUT_PAD * 2 + N_OUT_PAD * 4)
    bytes_accessed = padded_batch * (N_INPUT * 4 + N_OUT_PAD * 4) + weight_bytes

    out_padded = pl.pallas_call(
        _make_mlp_kernel(n_hidden, _activation_dtype()),
        out_shape=jax.ShapeDtypeStruct((padded_batch, N_OUT_PAD), jnp.float32),
        grid=grid,
        in_specs=in_specs,
        out_specs=pl.BlockSpec((tile_b, N_OUT_PAD), lambda i: (i, 0)),
        compiler_params=pltpu.CompilerParams(
            dimension_semantics=("parallel",)),
        cost_estimate=pl.CostEstimate(
            flops=flops,
            transcendentals=transcendentals,
            bytes_accessed=bytes_accessed),
    )(x, w_in_bf, b_in, *hidden_flat, w_out_bf, b_out_p)

    return out_padded[:batch, :N_OUTPUT]


def init_params(key, n_h=N_H):
    """Deterministic init mirroring the module: weights ~ U(-0.1, 0.1); biases use PyTorch's
    default U(-1/sqrt(fan_in), 1/sqrt(fan_in))."""
    assert n_h >= 1
    ks = jax.random.split(key, 4 + 2 * (n_h - 1))
    ki = iter(ks)
    w_in = jax.random.uniform(next(ki), (N_INPUT, SIZE_H), jnp.float32, -0.1, 0.1)
    b_in = jax.random.uniform(next(ki), (1, SIZE_H), jnp.float32,
                              -1.0 / jnp.sqrt(float(N_INPUT)), 1.0 / jnp.sqrt(float(N_INPUT)))
    hidden = []
    for _ in range(n_h - 1):
        w_h = jax.random.uniform(next(ki), (SIZE_H, SIZE_H), jnp.float32, -0.1, 0.1)
        b_h = jax.random.uniform(next(ki), (1, SIZE_H), jnp.float32,
                                 -1.0 / jnp.sqrt(float(SIZE_H)), 1.0 / jnp.sqrt(float(SIZE_H)))
        hidden.append((w_h, b_h))
    w_out = jax.random.uniform(next(ki), (SIZE_H, N_OUTPUT), jnp.float32, -0.1, 0.1)
    b_out = jax.random.uniform(next(ki), (1, N_OUTPUT), jnp.float32,
                               -1.0 / jnp.sqrt(float(SIZE_H)), 1.0 / jnp.sqrt(float(SIZE_H)))
    return w_in, b_in, tuple(hidden), w_out, b_out


def mlp_reference(x, params):
    w_in, b_in, hidden, w_out, b_out = params
    h = jnp.tanh(x.reshape(-1, N_INPUT) @ w_in + b_in)
    for w_h, b_h in hidden:
        h = jnp.tanh(h @ w_h + b_h)
    return h @ w_out + b_out


if __name__ == "__main__":
    key = jax.random.PRNGKey(0)
    k_x, k_p, k_x2 = jax.random.split(key, 3)
    params = init_params(k_p)

    # Small check (single 8-row tile).
    batch = 8
    x = jax.random.normal(k_x, (batch, N_INPUT), jnp.float32)
    out = jax.block_until_ready(mlp_forward(x, params))
    ref = mlp_reference(x, params)
    assert out.shape == (batch, N_OUTPUT)
    # bf16 MXU operands (f32 accumulate) -> loosened tolerance vs. pure-f32 reference.
    assert jnp.allclose(out, ref, atol=5e-2, rtol=5e-2)

    # Larger check exercising balanced batch tiling + padding (tile_b=304, grid of 2 steps).
    batch2 = 600
    x2 = jax.random.normal(k_x2, (batch2, N_INPUT), jnp.float32)
    out2 = jax.block_until_ready(mlp_forward(x2, params))
    ref2 = mlp_reference(x2, params)
    assert out2.shape == (batch2, N_OUTPUT)
    assert jnp.allclose(out2, ref2, atol=5e-2, rtol=5e-2)

    print("KERNEL_OK")
</pallas_src>

<mosaic_0001>
module attributes {stable_mosaic.version = 11 : i64} {
  func.func @kernel(%arg0: i32, %arg1: memref<8x7xf32, #tpu.memory_space<vmem>>, %arg2: memref<7x128xbf16, #tpu.memory_space<vmem>>, %arg3: memref<1x128xf32, #tpu.memory_space<vmem>>, %arg4: memref<128x128xbf16, #tpu.memory_space<vmem>>, %arg5: memref<1x128xf32, #tpu.memory_space<vmem>>, %arg6: memref<128x8xbf16, #tpu.memory_space<vmem>>, %arg7: memref<1x8xf32, #tpu.memory_space<vmem>>, %arg8: memref<8x8xf32, #tpu.memory_space<vmem>>) attributes {dimension_semantics = [#tpu.dimension_semantics<parallel>], iteration_bounds = array<i64: 1>, scalar_prefetch = 0 : i64, scratch_operands = 0 : i64, tpu.core_type = #tpu.core_type<tc>, window_params = [{transform_indices = @transform_0, window_bounds = array<i64: 8, 7>}, {pipeline_mode = #tpu.pipeline_mode<synchronous>, transform_indices = @transform_1, window_bounds = array<i64: 7, 128>}, {pipeline_mode = #tpu.pipeline_mode<synchronous>, transform_indices = @transform_2, window_bounds = array<i64: 1, 128>}, {pipeline_mode = #tpu.pipeline_mode<synchronous>, transform_indices = @transform_3, window_bounds = array<i64: 128, 128>}, {pipeline_mode = #tpu.pipeline_mode<synchronous>, transform_indices = @transform_4, window_bounds = array<i64: 1, 128>}, {pipeline_mode = #tpu.pipeline_mode<synchronous>, transform_indices = @transform_5, window_bounds = array<i64: 128, 8>}, {pipeline_mode = #tpu.pipeline_mode<synchronous>, transform_indices = @transform_6, window_bounds = array<i64: 1, 8>}, {transform_indices = @transform_7, window_bounds = array<i64: 8, 8>}]} {
    %c0 = arith.constant 0 : index
    %c0_0 = arith.constant 0 : index
    %0 = vector.load %arg1[%c0, %c0_0] : memref<8x7xf32, #tpu.memory_space<vmem>>, vector<8x7xf32>
    %1 = arith.truncf %0 : vector<8x7xf32> to vector<8x7xbf16>
    %c0_1 = arith.constant 0 : index
    %c0_2 = arith.constant 0 : index
    %2 = vector.load %arg2[%c0_1, %c0_2] : memref<7x128xbf16, #tpu.memory_space<vmem>>, vector<7x128xbf16>
    %cst = arith.constant dense<0.000000e+00> : vector<8x128xf32>
    %3 = tpu.matmul %1, %2, %cst {dimension_numbers = #tpu.dot_dimension_numbers<[1], [0], [0], [1], [0, 0, 1, 1], [], []>} : vector<8x7xbf16>, vector<7x128xbf16>, vector<8x128xf32> -> vector<8x128xf32>
    %c0_3 = arith.constant 0 : index
    %c0_4 = arith.constant 0 : index
    %4 = vector.load %arg3[%c0_3, %c0_4] : memref<1x128xf32, #tpu.memory_space<vmem>>, vector<1x128xf32>
    %5 = vector.broadcast %4 : vector<1x128xf32> to vector<8x128xf32>
    %6 = arith.addf %3, %5 : vector<8x128xf32>
    %7 = arith.truncf %6 : vector<8x128xf32> to vector<8x128xbf16>
    %8 = math.tanh %7 : vector<8x128xbf16>
    %c0_5 = arith.constant 0 : index
    %c0_6 = arith.constant 0 : index
    %9 = vector.load %arg4[%c0_5, %c0_6] : memref<128x128xbf16, #tpu.memory_space<vmem>>, vector<128x128xbf16>
    %cst_7 = arith.constant dense<0.000000e+00> : vector<8x128xf32>
    %10 = tpu.matmul %8, %9, %cst_7 {dimension_numbers = #tpu.dot_dimension_numbers<[1], [0], [0], [1], [0, 0, 1, 1], [], []>} : vector<8x128xbf16>, vector<128x128xbf16>, vector<8x128xf32> -> vector<8x128xf32>
    %c0_8 = arith.constant 0 : index
    %c0_9 = arith.constant 0 : index
    %11 = vector.load %arg5[%c0_8, %c0_9] : memref<1x128xf32, #tpu.memory_space<vmem>>, vector<1x128xf32>
    %12 = vector.broadcast %11 : vector<1x128xf32> to vector<8x128xf32>
    %13 = arith.addf %10, %12 : vector<8x128xf32>
    %14 = arith.truncf %13 : vector<8x128xf32> to vector<8x128xbf16>
    %15 = math.tanh %14 : vector<8x128xbf16>
    %c0_10 = arith.constant 0 : index
    %c0_11 = arith.constant 0 : index
    %16 = vector.load %arg6[%c0_10, %c0_11] : memref<128x8xbf16, #tpu.memory_space<vmem>>, vector<128x8xbf16>
    %cst_12 = arith.constant dense<0.000000e+00> : vector<8x8xf32>
    %17 = tpu.matmul %15, %16, %cst_12 {dimension_numbers = #tpu.dot_dimension_numbers<[1], [0], [0], [1], [0, 0, 1, 1], [], []>} : vector<8x128xbf16>, vector<128x8xbf16>, vector<8x8xf32> -> vector<8x8xf32>
    %c0_13 = arith.constant 0 : index
    %c0_14 = arith.constant 0 : index
    %18 = vector.load %arg7[%c0_13, %c0_14] : memref<1x8xf32, #tpu.memory_space<vmem>>, vector<1x8xf32>
    %19 = vector.broadcast %18 : vector<1x8xf32> to vector<8x8xf32>
    %20 = arith.addf %17, %19 : vector<8x8xf32>
    %c0_15 = arith.constant 0 : index
    %c0_16 = arith.constant 0 : index
    %21 = vector.load %arg8[%c0_15, %c0_16] : memref<8x8xf32, #tpu.memory_space<vmem>>, vector<8x8xf32>
    tpu.vector_store %arg8[%c0_15, %c0_16], %20 {strides = array<i32>} : memref<8x8xf32, #tpu.memory_space<vmem>>, vector<8x8xf32>,
    return
  }
  func.func @transform_0(%arg0: i32) -> (i32, i32) {
    %c0_i32 = arith.constant 0 : i32
    %c0_i32_0 = arith.constant 0 : i32
    return %arg0, %c0_i32 : i32, i32
  }
  func.func @transform_1(%arg0: i32) -> (i32, i32) {
    %c0_i32 = arith.constant 0 : i32
    %c0_i32_0 = arith.constant 0 : i32
    %c0_i32_1 = arith.constant 0 : i32
    return %c0_i32, %c0_i32_0 : i32, i32
  }
  func.func @transform_2(%arg0: i32) -> (i32, i32) {
    %c0_i32 = arith.constant 0 : i32
    %c0_i32_0 = arith.constant 0 : i32
    %c0_i32_1 = arith.constant 0 : i32
    return %c0_i32, %c0_i32_0 : i32, i32
  }
  func.func @transform_3(%arg0: i32) -> (i32, i32) {
    %c0_i32 = arith.constant 0 : i32
    %c0_i32_0 = arith.constant 0 : i32
    %c0_i32_1 = arith.constant 0 : i32
    return %c0_i32, %c0_i32_0 : i32, i32
  }
  func.func @transform_4(%arg0: i32) -> (i32, i32) {
    %c0_i32 = arith.constant 0 : i32
    %c0_i32_0 = arith.constant 0 : i32
    %c0_i32_1 = arith.constant 0 : i32
    return %c0_i32, %c0_i32_0 : i32, i32
  }
  func.func @transform_5(%arg0: i32) -> (i32, i32) {
    %c0_i32 = arith.constant 0 : i32
    %c0_i32_0 = arith.constant 0 : i32
    %c0_i32_1 = arith.constant 0 : i32
    return %c0_i32, %c0_i32_0 : i32, i32
  }
  func.func @transform_6(%arg0: i32) -> (i32, i32) {
    %c0_i32 = arith.constant 0 : i32
    %c0_i32_0 = arith.constant 0 : i32
    %c0_i32_1 = arith.constant 0 : i32
    return %c0_i32, %c0_i32_0 : i32, i32
  }
  func.func @transform_7(%arg0: i32) -> (i32, i32) {
    %c0_i32 = arith.constant 0 : i32
    %c0_i32_0 = arith.constant 0 : i32
    return %arg0, %c0_i32 : i32, i32
  }
}

</mosaic_0001>

<llo_original>
// kernel: tpu_custom_call.1
$region0: #{tpu_custom_call.1}
  #allocation0 [shape = 'u32[]', space=smem, size = 0x4, offset = 0x4, fixed_abs, tag = 'smem constant byte address 0x4 - core index']
  #allocation1 [shape = 'u32[144,128]{1,0:T(1,128)}', space=vmem, size = 0x12000, scoped, tag = 'internal scratch']
  %s0 = inlined_call_operand.vmem [shape: f32[8,7], index: 0, kind: input, shape index: {}]
  %s1 = inlined_call_operand.vmem [shape: bf16[7,128], index: 1, kind: input, shape index: {}]
  %s2 = inlined_call_operand.vmem [shape: f32[1,128], index: 2, kind: input, shape index: {}]
  %s3 = inlined_call_operand.vmem [shape: bf16[128,128], index: 3, kind: input, shape index: {}]
  %s4 = inlined_call_operand.vmem [shape: f32[1,128], index: 4, kind: input, shape index: {}]
  %s5 = inlined_call_operand.vmem [shape: bf16[128,8], index: 5, kind: input, shape index: {}]
  %s6 = inlined_call_operand.vmem [shape: f32[1,8], index: 6, kind: input, shape index: {}]
  %s7 = inlined_call_operand.hbm [shape: f32[8,8], index: 7, kind: output, shape index: {}]
  %s8 = sld [smem:[#allocation0]]
  $region38: #{tpu_custom_call.1} parent=0
    _
  %s10 = ssub.s32 1, %s8
  %s11 = scalar_select 0, %s10, %s8
  $region1: #{tpu_custom_call.1} parent=0
    #allocation2 [shape = 'u8[4096]{0}', space=vmem, size = 0x1000, scoped, tag = 'output window, operand 0, single buffered']
    #allocation3 [shape = 's32[1]{0}', space=sflag, size = 0x4, scoped, tag = 'scoped memory for tpu_custom_call.1']
    %12 = vsyncpa [#allocation3], 0
    // Predicated region
    $region2: #{tpu_custom_call.1} parent=1 // pred_check
      _
    $region3: #{tpu_custom_call.1} parent=1 // pred_check_branch
      %14 = sbr.rel (0) target = $region5
    $region4: #{tpu_custom_call.1} parent=1 // pred_region
      _
    $region5: #{tpu_custom_call.1} parent=1 // pred_fallthru
      _
    // Predicated region
    $region6: #{tpu_custom_call.1} parent=1 // pred_check
      _
    $region7: #{tpu_custom_call.1} parent=1 // pred_check_branch
      %16 = sbr.rel (0) target = $region9
    $region8: #{tpu_custom_call.1} parent=1 // pred_region
      _
    $region9: #{tpu_custom_call.1} parent=1 // pred_fallthru
      _
    // Predicated region
    $region10: #{tpu_custom_call.1} parent=1 // pred_check
      _
    $region11: #{tpu_custom_call.1} parent=1 // pred_check_branch
      %18 = sbr.rel (0) target = $region13
    $region12: #{tpu_custom_call.1} parent=1 // pred_region
      _
    $region13: #{tpu_custom_call.1} parent=1 // pred_fallthru
      _
    // Predicated region
    $region14: #{tpu_custom_call.1} parent=1 // pred_check
      _
    $region15: #{tpu_custom_call.1} parent=1 // pred_check_branch
      %20 = sbr.rel (0) target = $region17
    $region16: #{tpu_custom_call.1} parent=1 // pred_region
      _
    $region17: #{tpu_custom_call.1} parent=1 // pred_fallthru
      _
    // Predicated region
    $region18: #{tpu_custom_call.1} parent=1 // pred_check
      _
    $region19: #{tpu_custom_call.1} parent=1 // pred_check_branch
      %22 = sbr.rel (0) target = $region21
    $region20: #{tpu_custom_call.1} parent=1 // pred_region
      _
    $region21: #{tpu_custom_call.1} parent=1 // pred_fallthru
      _
    // Predicated region
    $region22: #{tpu_custom_call.1} parent=1 // pred_check
      _
    $region23: #{tpu_custom_call.1} parent=1 // pred_check_branch
      %24 = sbr.rel (0) target = $region25
    $region24: #{tpu_custom_call.1} parent=1 // pred_region
      _
    $region25: #{tpu_custom_call.1} parent=1 // pred_fallthru
      _
    // Predicated region
    $region26: #{tpu_custom_call.1} parent=1 // pred_check
      _
    $region27: #{tpu_custom_call.1} parent=1 // pred_check_branch
      %26 = sbr.rel (0) target = $region29
    $region28: #{tpu_custom_call.1} parent=1 // pred_region
      _
    $region29: #{tpu_custom_call.1} parent=1 // pred_fallthru
      _
    %v28 = vld [vmem:[%s0] sm:$0xff]
    %v29 = vpack.c.bf16 %v28, %v28
    %v30 = vld [vmem:[%s1] sm:$0xf]
    %v31 = vld [vmem:[%s2] sm:$0x1]
    %v33 = vlaneseq
    %v34 = vshrl.u32 %v33, 7
    %v35 = vsub.s32 0, %v34
    %v36 = vrot.slane %v31, %v35
    %vm38 = vcmask 56320
    %v40 = vsel %vm38, %v29, 0
    %vm42 = vcmask 1042432
    %vm43 = vcmask 1043456
    %v44 = vsel %vm42, 4294967295, 65535
    %v45 = vsel %vm43, %v44, 0
    %v47 = vand.u32 %v30, %v45
    %49 = vmatprep.subr.bf16.mxu0 0
    %50 = vmatpush1.bf16.msra.mxu0 %v47
    %51 = vmatprep.subr.bf16.mxu0 0
    %52 = vmatpush1.bf16.msra.mxu0 0
    %53 = vmatprep.subr.bf16.mxu0 0
    %54 = vmatpush1.bf16.msra.mxu0 0
    %55 = vmatprep.subr.bf16.mxu0 0
    %56 = vmatpush1.bf16.msra.mxu0 0
    %57 = vmatprep.subr.bf16.mxu0 0
    %58 = vmatpush1.bf16.msra.mxu0 0
    %59 = vmatprep.subr.bf16.mxu0 0
    %60 = vmatpush1.bf16.msra.mxu0 0
    %61 = vmatprep.subr.bf16.mxu0 0
    %62 = vmatpush1.bf16.msra.mxu0 0
    %63 = vmatprep.subr.bf16.mxu0 0
    %64 = vmatpush1.bf16.msra.mxu0 0
    %65 = vmatprep.subr.bf16.mxu0 0
    %66 = vmatpush1.bf16.msra.mxu0 0
    %67 = vmatprep.subr.bf16.mxu0 0
    %68 = vmatpush1.bf16.msra.mxu0 0
    %69 = vmatprep.subr.bf16.mxu0 0
    %70 = vmatpush1.bf16.msra.mxu0 0
    %71 = vmatprep.subr.bf16.mxu0 0
    %72 = vmatpush1.bf16.msra.mxu0 0
    %73 = vmatprep.subr.bf16.mxu0 0
    %74 = vmatpush1.bf16.msra.mxu0 0
    %75 = vmatprep.subr.bf16.mxu0 0
    %76 = vmatpush1.bf16.msra.mxu0 0
    %77 = vmatprep.subr.bf16.mxu0 0
    %78 = vmatpush1.bf16.msra.mxu0 0
    %79 = vmatprep.subr.bf16.mxu0 0
    %80 = vmatpush1.bf16.msra.mxu0 0
    %81 = vmatprep.mubr.bf16.mxu0 0
    %82 = vmatmul.mubr.bf16.gmra.mrb[0].mxu0 %v40
    %v83 = vpop.f32.mrb[0].mxu0
    %v84 = vadd.f32 %v36, %v83
    %v85 = vpop.f32.mrb[0].mxu0
    %v86 = vpop.f32.mrb[0].mxu0
    %v87 = vpop.f32.mrb[0].mxu0
    %88 = vdwg.mxu0
    %v89 = vpack.c.bf16 %v84, %v84
    %v90 = vtanh.bf16.pop %v89
    %v91 = vld [vmem:[%s3] sm:$0xf]
    %v92 = vld [vmem:[%s3 + $0x4] sm:$0xf]
    %v93 = vld [vmem:[%s3 + $0x8] sm:$0xf]
    %v94 = vld [vmem:[%s3 + $0xc] sm:$0xf]
    %v95 = vld [vmem:[%s3 + $0x10] sm:$0xf]
    %v96 = vld [vmem:[%s3 + $0x14] sm:$0xf]
    %v97 = vld [vmem:[%s3 + $0x18] sm:$0xf]
    %v98 = vld [vmem:[%s3 + $0x1c] sm:$0xf]
    %v99 = vld [vmem:[%s3 + $0x20] sm:$0xf]
    %v100 = vld [vmem:[%s3 + $0x24] sm:$0xf]
    %v101 = vld [vmem:[%s3 + $0x28] sm:$0xf]
    %v102 = vld [vmem:[%s3 + $0x2c] sm:$0xf]
    %v103 = vld [vmem:[%s3 + $0x30] sm:$0xf]
    %v104 = vld [vmem:[%s3 + $0x34] sm:$0xf]
    %v105 = vld [vmem:[%s3 + $0x38] sm:$0xf]
    %v106 = vld [vmem:[%s3 + $0x3c] sm:$0xf]
    %v107 = vld [vmem:[%s4] sm:$0x1]
    %v109 = vlaneseq
    %v110 = vshrl.u32 %v109, 7
    %v111 = vsub.s32 0, %v110
    %v112 = vrot.slane %v107, %v111
    %v130 = vunpack.c.l.b16 %v91
    %v131 = vunpack.c.l.b16 %v92
    %v132 = vunpack.c.l.b16 %v93
    %v133 = vunpack.c.l.b16 %v94
    %v134 = vunpack.c.l.b16 %v95
    %v135 = vunpack.c.l.b16 %v96
    %v136 = vunpack.c.l.b16 %v97
    %v137 = vunpack.c.l.b16 %v98
    %v138 = vunpack.c.l.b16 %v99
    %v139 = vunpack.c.l.b16 %v100
    %v140 = vunpack.c.l.b16 %v101
    %v141 = vunpack.c.l.b16 %v102
    %v142 = vunpack.c.l.b16 %v103
    %v143 = vunpack.c.l.b16 %v104
    %v144 = vunpack.c.l.b16 %v105
    %v145 = vunpack.c.l.b16 %v106
    %v146 = vpack.c.b16 %v131, %v130
    %v147 = vpack.c.b16 %v133, %v132
    %v148 = vpack.c.b16 %v135, %v134
    %v149 = vpack.c.b16 %v137, %v136
    %v150 = vpack.c.b16 %v139, %v138
    %v151 = vpack.c.b16 %v141, %v140
    %v152 = vpack.c.b16 %v143, %v142
    %v153 = vpack.c.b16 %v145, %v144
    %162 = vmatprep.subr.bf16.mxu0 0
    %163 = vmatpush1.bf16.msra.mxu0 %v146
    %164 = vmatprep.subr.bf16.mxu0 0
    %165 = vmatpush1.bf16.msra.mxu0 %v147
    %166 = vmatprep.subr.bf16.mxu0 0
    %167 = vmatpush1.bf16.msra.mxu0 %v148
    %168 = vmatprep.subr.bf16.mxu0 0
    %169 = vmatpush1.bf16.msra.mxu0 %v149
    %170 = vmatprep.subr.bf16.mxu0 0
    %171 = vmatpush1.bf16.msra.mxu0 %v150
    %172 = vmatprep.subr.bf16.mxu0 0
    %173 = vmatpush1.bf16.msra.mxu0 %v151
    %174 = vmatprep.subr.bf16.mxu0 0
    %175 = vmatpush1.bf16.msra.mxu0 %v152
    %176 = vmatprep.subr.bf16.mxu0 0
    %177 = vmatpush1.bf16.msra.mxu0 %v153
    %178 = vmatprep.subr.bf16.mxu0 0
    %179 = vmatpush1.bf16.msra.mxu0 0
    %180 = vmatprep.subr.bf16.mxu0 0
    %181 = vmatpush1.bf16.msra.mxu0 0
    %182 = vmatprep.subr.bf16.mxu0 0
    %183 = vmatpush1.bf16.msra.mxu0 0
    %184 = vmatprep.subr.bf16.mxu0 0
    %185 = vmatpush1.bf16.msra.mxu0 0
    %186 = vmatprep.subr.bf16.mxu0 0
    %187 = vmatpush1.bf16.msra.mxu0 0
    %188 = vmatprep.subr.bf16.mxu0 0
    %189 = vmatpush1.bf16.msra.mxu0 0
    %190 = vmatprep.subr.bf16.mxu0 0
    %191 = vmatpush1.bf16.msra.mxu0 0
    %192 = vmatprep.subr.bf16.mxu0 0
    %193 = vmatpush1.bf16.msra.mxu0 0
    %194 = vmatprep.mubr.bf16.mxu0 0
    %195 = vmatmul.mubr.bf16.gmra.mrb[0].mxu0 %v90
    %v196 = vpop.f32.mrb[0].mxu0
    %v197 = vadd.f32 %v112, %v196
    %v198 = vpop.f32.mrb[0].mxu0
    %v199 = vpop.f32.mrb[0].mxu0
    %v200 = vpop.f32.mrb[0].mxu0
    %201 = vdwg.mxu0
    %v202 = vpack.c.bf16 %v197, %v197
    %v203 = vtanh.bf16.pop %v202
    %v204 = vld [vmem:[%s5] sm:$0xf]
    %v205 = vld [vmem:[%s5 + $0x4] sm:$0xf]
    %v206 = vld [vmem:[%s5 + $0x8] sm:$0xf]
    %v207 = vld [vmem:[%s5 + $0xc] sm:$0xf]
    %v208 = vld [vmem:[%s5 + $0x10] sm:$0xf]
    %v209 = vld [vmem:[%s5 + $0x14] sm:$0xf]
    %v210 = vld [vmem:[%s5 + $0x18] sm:$0xf]
    %v211 = vld [vmem:[%s5 + $0x1c] sm:$0xf]
    %v212 = vld [vmem:[%s5 + $0x20] sm:$0xf]
    %v213 = vld [vmem:[%s5 + $0x24] sm:$0xf]
    %v214 = vld [vmem:[%s5 + $0x28] sm:$0xf]
    %v215 = vld [vmem:[%s5 + $0x2c] sm:$0xf]
    %v216 = vld [vmem:[%s5 + $0x30] sm:$0xf]
    %v217 = vld [vmem:[%s5 + $0x34] sm:$0xf]
    %v218 = vld [vmem:[%s5 + $0x38] sm:$0xf]
    %v219 = vld [vmem:[%s5 + $0x3c] sm:$0xf]
    %v220 = vld [vmem:[%s6] sm:$0x1]
    %v222 = vlaneseq
    %v223 = vshrl.u32 %v222, 7
    %v224 = vsub.s32 0, %v223
    %v225 = vrot.slane %v220, %v224
    %v243 = vunpack.c.l.b16 %v204
    %v244 = vunpack.c.l.b16 %v205
    %v245 = vunpack.c.l.b16 %v206
    %v246 = vunpack.c.l.b16 %v207
    %v247 = vunpack.c.l.b16 %v208
    %v248 = vunpack.c.l.b16 %v209
    %v249 = vunpack.c.l.b16 %v210
    %v250 = vunpack.c.l.b16 %v211
    %v251 = vunpack.c.l.b16 %v212
    %v252 = vunpack.c.l.b16 %v213
    %v253 = vunpack.c.l.b16 %v214
    %v254 = vunpack.c.l.b16 %v215
    %v255 = vunpack.c.l.b16 %v216
    %v256 = vunpack.c.l.b16 %v217
    %v257 = vunpack.c.l.b16 %v218
    %v258 = vunpack.c.l.b16 %v219
    %v259 = vpack.c.b16 %v244, %v243
    %v260 = vpack.c.b16 %v246, %v245
    %v261 = vpack.c.b16 %v248, %v247
    %v262 = vpack.c.b16 %v250, %v249
    %v263 = vpack.c.b16 %v252, %v251
    %v264 = vpack.c.b16 %v254, %v253
    %v265 = vpack.c.b16 %v256, %v255
    %v266 = vpack.c.b16 %v258, %v257
    %275 = vmatprep.subr.bf16.mxu0 0
    %276 = vmatpush1.bf16.msra.mxu0 %v259
    %277 = vmatprep.subr.bf16.mxu0 0
    %278 = vmatpush1.bf16.msra.mxu0 %v260
    %279 = vmatprep.subr.bf16.mxu0 0
    %280 = vmatpush1.bf16.msra.mxu0 %v261
    %281 = vmatprep.subr.bf16.mxu0 0
    %282 = vmatpush1.bf16.msra.mxu0 %v262
    %283 = vmatprep.subr.bf16.mxu0 0
    %284 = vmatpush1.bf16.msra.mxu0 %v263
    %285 = vmatprep.subr.bf16.mxu0 0
    %286 = vmatpush1.bf16.msra.mxu0 %v264
    %287 = vmatprep.subr.bf16.mxu0 0
    %288 = vmatpush1.bf16.msra.mxu0 %v265
    %289 = vmatprep.subr.bf16.mxu0 0
    %290 = vmatpush1.bf16.msra.mxu0 %v266
    %291 = vmatprep.subr.bf16.mxu0 0
    %292 = vmatpush1.bf16.msra.mxu0 0
    %293 = vmatprep.subr.bf16.mxu0 0
    %294 = vmatpush1.bf16.msra.mxu0 0
    %295 = vmatprep.subr.bf16.mxu0 0
    %296 = vmatpush1.bf16.msra.mxu0 0
    %297 = vmatprep.subr.bf16.mxu0 0
    %298 = vmatpush1.bf16.msra.mxu0 0
    %299 = vmatprep.subr.bf16.mxu0 0
    %300 = vmatpush1.bf16.msra.mxu0 0
    %301 = vmatprep.subr.bf16.mxu0 0
    %302 = vmatpush1.bf16.msra.mxu0 0
    %303 = vmatprep.subr.bf16.mxu0 0
    %304 = vmatpush1.bf16.msra.mxu0 0
    %305 = vmatprep.subr.bf16.mxu0 0
    %306 = vmatpush1.bf16.msra.mxu0 0
    %307 = vmatprep.mubr.bf16.mxu0 0
    %308 = vmatmul.mubr.bf16.gmra.mrb[0].mxu0 %v203
    %v309 = vpop.f32.mrb[0].mxu0
    %v310 = vadd.f32 %v225, %v309
    %v311 = vpop.f32.mrb[0].mxu0
    %v312 = vpop.f32.mrb[0].mxu0
    %v313 = vpop.f32.mrb[0].mxu0
    %314 = vdwg.mxu0
    %vm315 = vcmask 64512
    %316 = vst.msk [vmem:[#allocation2] sm:$0xff] %vm315, %v310
    // Predicated region
    $region30: #{tpu_custom_call.1} parent=1 // pred_check
      _
    $region31: #{tpu_custom_call.1} parent=1 // pred_check_branch
      %318 = sbr.rel (0) target = $region33
    $region32: #{tpu_custom_call.1} parent=1 // pred_region
      %s320 = ssub.s32 128, 128
      %321 = vsyncadd [#allocation3], %s320
      %s323 = sshll.u32 [#allocation2], 4
      %s324 = int_to_ptr.vmem [resolvable:$true] %s323
      %326 = dma.vmem_to_hbm [thread:$0]  %s324, 128, %s7, [#allocation3]
    $region33: #{tpu_custom_call.1} parent=1 // pred_fallthru
      _
    // Predicated region
    $region34: #{tpu_custom_call.1} parent=1 // pred_check
      _
    $region35: #{tpu_custom_call.1} parent=1 // pred_check_branch
      %328 = sbr.rel (0) target = $region37
    $region36: #{tpu_custom_call.1} parent=1 // pred_region
      %329 = dma.done [#allocation3], 128
    $region37: #{tpu_custom_call.1} parent=1 // pred_fallthru
      _
    %330 = vsyncpa [#allocation3], 1

</llo_original>
